<compile_context>
chip_gen: v7x
topology: tpu7x:2x2x1
jax: 0.10.0
libtpu: 0.0.40
codegen_flags: <defaults>
</compile_context>

<pallas_src>
import functools

import numpy as np

import jax
import jax.numpy as jnp
from jax.experimental import pallas as pl
from jax.experimental.pallas import tpu as pltpu

# ----------------- small config (scaled-down module defaults) -----------------
NUM_W = 32                  # encoder.num_w              (original: 1024)
NUM_UNET_LAYERS = 4         # len(UNET_LAYERS)           (original: 16)
NUM_PE_TIME_ANCHORS = 10    # num_pe_time_anchors
INPUT_DIM = NUM_PE_TIME_ANCHORS * NUM_UNET_LAYERS        # 40
H_DIM = 128                 # arch_mlp_hidden_dims
OUTPUT_DIM = 128            # word-embedding dim         (original: 768)
IMG_DIM = 32                # image_embeds dim           (original: token_embed_dim=768)
SIGMA_T = 0.03
SIGMA_L = 2.0
LN_EPS = 1e-5
LEAKY_SLOPE = 0.01          # nn.LeakyReLU default
OUTPUT_BYPASS_ALPHA = 0.2

TB_MAX = 2048               # batch-tile cap (step-overhead bound, not VMEM bound)


def _round_up(x, m):
    return ((x + m - 1) // m) * m


# -------------------------- positional encoder (glue) --------------------------
# TODO(synk): the NeTIPositionalEncoding subclass that consumes image_embeds was
# not provided with the module; it is reconstructed as random Fourier features on
# (t, l) concatenated with a fixed random projection of image_embeds (giving the
# 3*num_w width implied by `nn.Linear(self.encoder.num_w * 3, ...)`).
def make_encoder_params(key):
    kw, kp = jax.random.split(key)
    w = jax.random.normal(kw, (NUM_W, 2), jnp.float32)
    w = w * jnp.array([SIGMA_T, SIGMA_L], jnp.float32)            # per-column sigmas
    p_img = jax.random.normal(kp, (NUM_W, IMG_DIM), jnp.float32) / jnp.sqrt(IMG_DIM)
    return w, p_img


def encode_rowmajor(enc_w, enc_p, timestep, unet_layer, image_embeds):
    """Row-major encode: (B,), (B,), (B, IMG_DIM) -> (B, 3*NUM_W), row-normalized."""
    tl = jnp.stack([timestep.astype(jnp.float32),
                    unet_layer.astype(jnp.float32)], axis=-1)      # (B, 2)
    wx = tl @ enc_w.T                                              # (B, NUM_W)
    img = image_embeds.astype(jnp.float32) @ enc_p.T               # (B, NUM_W)
    v = jnp.concatenate([jnp.sin(wx), jnp.cos(wx), img], axis=-1)  # (B, 3*NUM_W)
    return v / jnp.linalg.norm(v, axis=-1, keepdims=True)


def init_input_layer_weight(enc_w, enc_p):
    """encoder.init_layer(): encode normalized (t, l) anchors -> (INPUT_DIM, 3*NUM_W)."""
    ts, ls = [], []
    for t_a in range(0, 1000, 1000 // NUM_PE_TIME_ANCHORS):
        for l_a in range(NUM_UNET_LAYERS):
            a = jnp.array([float(t_a), float(l_a)], jnp.float32)
            n = jnp.linalg.norm(a)
            a = jnp.where(n > 0, a / n, a)
            ts.append(a[0]); ls.append(a[1])
    ts = jnp.stack(ts)
    ls = jnp.stack(ls)
    img_zero = jnp.zeros((ts.shape[0], IMG_DIM), jnp.float32)
    return encode_rowmajor(enc_w, enc_p, ts, ls, img_zero)          # (INPUT_DIM, 3*NUM_W)


# --------------------------- shared forward math -------------------------------
def _ln_leaky(h, gamma, beta):
    mu = jnp.mean(h, axis=-1, keepdims=True)
    var = jnp.mean(jnp.square(h - mu), axis=-1, keepdims=True)
    h = (h - mu) * jax.lax.rsqrt(var + LN_EPS) * gamma + beta
    return jnp.where(h >= 0, h, LEAKY_SLOPE * h)


def _mapper_compute(feat, enc_w, enc_p, w_fused, w2, w_out, vecs_h, b_out):
    """Identical math used by the Pallas kernel body and the tiny-batch XLA fallback.

    feat: (N, IMG_DIM + 2) f32, lane layout [image_embeds | t | l].
    Returns (word, bypass) as (N, OUTPUT_DIM) f32 each.
    """
    f32, bf16 = jnp.float32, jnp.bfloat16

    img_in = feat[:, 0:IMG_DIM]                         # lane-0 aligned 32-wide slice
    t = feat[:, IMG_DIM:IMG_DIM + 1]
    l = feat[:, IMG_DIM + 1:IMG_DIM + 2]

    # ---------- fused positional encoding (no HBM round-trip for enc) ----------
    wx = t * enc_w[0:1, :] + l * enc_w[1:2, :]          # (N, NUM_W)
    sin_f = jnp.sin(wx)                                 # EUP
    cos_f = jnp.cos(wx)
    img = jnp.dot(img_in, enc_p, preferred_element_type=f32)        # (N, NUM_W)

    # Row normalization of concat([sin, cos, img]); since the next layer is linear
    # the per-row 1/||.|| scale is applied AFTER the fused matmul (exact fold).
    sq = (jnp.sum(jnp.square(sin_f), axis=-1, keepdims=True)
          + jnp.sum(jnp.square(cos_f), axis=-1, keepdims=True)
          + jnp.sum(jnp.square(img), axis=-1, keepdims=True))
    # eps guard: valid rows have sq >= NUM_W (cos^2 terms) so this is a no-op for
    # them, but it keeps garbage tail rows of a partial last block finite.
    inv_norm = jax.lax.rsqrt(sq + 1e-12)                # (N, 1)

    # ---------- input_layer folded into net Linear 1 (exact fold) --------------
    # w_fused rows are laid out [sin-block | cos-block | img-block]; three aligned
    # K=32 partial dots avoid any lane-concatenate of the sub-128-wide pieces.
    h = (jnp.dot(sin_f.astype(bf16), w_fused[0:NUM_W, :],
                 preferred_element_type=f32)
         + jnp.dot(cos_f.astype(bf16), w_fused[NUM_W:2 * NUM_W, :],
                   preferred_element_type=f32)
         + jnp.dot(img.astype(bf16), w_fused[2 * NUM_W:3 * NUM_W, :],
                   preferred_element_type=f32))
    h = h * inv_norm + vecs_h[0:1, :]                   # + b_fused
    h = _ln_leaky(h, vecs_h[1:2, :], vecs_h[2:3, :])

    # ------------------------------ net Linear 2 -------------------------------
    h = jnp.dot(h.astype(bf16), w2, preferred_element_type=f32) + vecs_h[3:4, :]
    h = _ln_leaky(h, vecs_h[4:5, :], vecs_h[5:6, :])

    # TODO(synk): apply_nested_dropout is a no-op in eval mode with
    # truncation_idx=None; the stochastic training-mode path is not implemented.

    # --------- output layer: one N=256 dot (full 256-wide MXU on v6e/v7x) ------
    out = jnp.dot(h.astype(bf16), w_out, preferred_element_type=f32) + b_out
    # 128-lane split is vreg-boundary aligned -> free, no XLU work, no HBM temp.
    return out[:, 0:OUTPUT_DIM], out[:, OUTPUT_DIM:2 * OUTPUT_DIM]


# ------------------------------- Pallas kernel --------------------------------
def neti_mapper_kernel(feat_ref, enc_w_ref, enc_p_ref,
                       w_fused_ref, w2_ref, w_out_ref,
                       vecs_h_ref, b_out_ref,
                       word_ref, bypass_ref):
    word, bypass = _mapper_compute(
        feat_ref[...], enc_w_ref[...], enc_p_ref[...],
        w_fused_ref[...], w2_ref[...], w_out_ref[...],
        vecs_h_ref[...], b_out_ref[...])
    word_ref[...] = word.astype(word_ref.dtype)
    bypass_ref[...] = bypass.astype(bypass_ref.dtype)


# --------------------------------- wrapper -------------------------------------
def prepare_params(params):
    """One-time packing / transposition / bf16 casting (outside the jitted forward)."""
    w_in = params["w_in"]                               # (INPUT_DIM, 3*NUM_W)
    w1 = params["w1"]                                   # (H_DIM, INPUT_DIM)
    # Exact algebraic fold of input_layer into net Linear 1:
    w_fused = w_in.T @ w1.T                             # (3*NUM_W, H_DIM)
    b_fused = params["b_in"] @ w1.T + params["b1"]      # (H_DIM,)

    vecs_h = jnp.zeros((8, H_DIM), jnp.float32)
    for r, v in enumerate([b_fused, params["g1"], params["be1"],
                           params["b2"], params["g2"], params["be2"]]):
        vecs_h = vecs_h.at[r].set(v.astype(jnp.float32))

    return {
        "enc_wT": params["enc_w"].T.astype(jnp.float32),          # (2, NUM_W)
        "enc_pT": params["enc_p"].T.astype(jnp.float32),          # (IMG_DIM, NUM_W)
        "w_fused": w_fused.astype(jnp.bfloat16),                  # (3*NUM_W, H_DIM)
        "w2": params["w2"].T.astype(jnp.bfloat16),                # (H_DIM, H_DIM)
        "w_out": params["w_out"].T.astype(jnp.bfloat16),          # (H_DIM, 2*OUTPUT_DIM)
        "vecs_h": vecs_h,                                         # (8, H_DIM)
        "b_out": params["b_out"][None, :].astype(jnp.float32),    # (1, 2*OUTPUT_DIM)
    }


def _default_batch_tile(B):
    # This kernel is per-grid-step-overhead / HBM-writeback bound, so bigger tiles
    # are strictly better.  VMEM is never the constraint on any generation
    # (~200 KiB of resident weights + ~2.3 KiB/row of double-buffered streamed
    # data, far below even v7x's 64 MiB physical / 32 MiB scoped-default VMEM).
    # The only v7x-specific constraint is grid-step count: keep >= 2 steps for
    # large batches so dimension_semantics=("parallel",) can shard the grid across
    # the two TensorCores.  Cap at 2048 rows.
    if B <= 16:
        return B                                       # single full-batch block
    return min(TB_MAX, max(8, _round_up(pl.cdiv(B, 2), 8)))


def _cost_estimate(B, out_itemsize):
    flops_row = 2 * (IMG_DIM * NUM_W                   # image projection
                     + 3 * NUM_W * H_DIM               # fused input+L1
                     + H_DIM * H_DIM                   # L2
                     + H_DIM * 2 * OUTPUT_DIM)         # output layer
    trans_row = 2 * NUM_W + 3                          # sin/cos + norm/LN rsqrts
    bytes_row = 4 * (IMG_DIM + 2) + out_itemsize * 2 * OUTPUT_DIM
    weight_bytes = (2 * (3 * NUM_W * H_DIM + H_DIM * H_DIM + H_DIM * 2 * OUTPUT_DIM)
                    + 4 * (2 * NUM_W + IMG_DIM * NUM_W + 8 * H_DIM + 2 * OUTPUT_DIM))
    return pl.CostEstimate(flops=int(B * flops_row),
                           transcendentals=int(B * trans_row),
                           bytes_accessed=int(B * bytes_row + weight_bytes))


def neti_mapper_forward(packed, timestep, unet_layer, image_embeds,
                        batch_tile=None, out_dtype=jnp.float32,
                        small_batch_fallback=0):
    """out_dtype=jnp.bfloat16 halves the dominant output writeback if the consumer
    tolerates it.  small_batch_fallback=N (e.g. 64) routes batches smaller than N
    through an identical pure-XLA path, avoiding the fixed pallas_call launch
    latency; default 0 always uses the kernel."""
    B = timestep.shape[0]

    # One lane-contiguous streamed input: [image_embeds | t | l]  -> (B, IMG_DIM+2)
    feat = jnp.concatenate(
        [image_embeds.astype(jnp.float32),
         timestep.astype(jnp.float32)[:, None],
         unet_layer.astype(jnp.float32)[:, None]], axis=-1)

    if B < small_batch_fallback:
        word, bypass = _mapper_compute(
            feat, packed["enc_wT"], packed["enc_pT"], packed["w_fused"],
            packed["w2"], packed["w_out"], packed["vecs_h"], packed["b_out"])
        word = word.astype(out_dtype)
        bypass = bypass.astype(out_dtype)
    else:
        TB = batch_tile if batch_tile is not None else _default_batch_tile(B)
        grid = (pl.cdiv(B, TB),)      # no input pad, no output slice: Pallas masks
                                      # the partial last block (math is row-local).
        row = lambda i: (i, 0)        # streamed per-batch-tile
        const = lambda i: (0, 0)      # VMEM-resident across grid steps

        word, bypass = pl.pallas_call(
            neti_mapper_kernel,
            out_shape=(jax.ShapeDtypeStruct((B, OUTPUT_DIM), out_dtype),
                       jax.ShapeDtypeStruct((B, OUTPUT_DIM), out_dtype)),
            grid=grid,
            in_specs=[
                pl.BlockSpec((TB, IMG_DIM + 2), row),            # [img | t | l]
                pl.BlockSpec((2, NUM_W), const),                 # enc_w^T
                pl.BlockSpec((IMG_DIM, NUM_W), const),           # enc_p^T
                pl.BlockSpec((3 * NUM_W, H_DIM), const),         # fused input+L1 weight
                pl.BlockSpec((H_DIM, H_DIM), const),             # L2 weight
                pl.BlockSpec((H_DIM, 2 * OUTPUT_DIM), const),    # output weight
                pl.BlockSpec((8, H_DIM), const),                 # packed bias/LN vectors
                pl.BlockSpec((1, 2 * OUTPUT_DIM), const),        # output bias
            ],
            out_specs=(pl.BlockSpec((TB, OUTPUT_DIM), row),
                       pl.BlockSpec((TB, OUTPUT_DIM), row)),
            compiler_params=pltpu.CompilerParams(
                dimension_semantics=("parallel",)),
            cost_estimate=_cost_estimate(B, np.dtype(out_dtype).itemsize),
        )(feat, packed["enc_wT"], packed["enc_pT"], packed["w_fused"],
          packed["w2"], packed["w_out"], packed["vecs_h"], packed["b_out"])

    # MapperOutput
    return {
        "word_embedding": word,
        "bypass_output": bypass,
        "bypass_unconstrained": True,
        "output_bypass": True,
        "output_bypass_alpha": OUTPUT_BYPASS_ALPHA,
    }


# ------------------------------- reference (JAX) -------------------------------
def reference_forward(params, timestep, unet_layer, image_embeds):
    enc = encode_rowmajor(params["enc_w"], params["enc_p"],
                          timestep, unet_layer, image_embeds)

    def ln_leaky(h, g, b):
        mu = h.mean(-1, keepdims=True)
        var = ((h - mu) ** 2).mean(-1, keepdims=True)
        h = (h - mu) / jnp.sqrt(var + LN_EPS) * g + b
        return jnp.where(h >= 0, h, LEAKY_SLOPE * h)

    h = enc @ params["w_in"].T + params["b_in"]
    h = ln_leaky(h @ params["w1"].T + params["b1"], params["g1"], params["be1"])
    h = ln_leaky(h @ params["w2"].T + params["b2"], params["g2"], params["be2"])
    out = h @ params["w_out"].T + params["b_out"]
    return out[:, :OUTPUT_DIM], out[:, OUTPUT_DIM:]


# ----------------------------------- main ---------------------------------------
def make_params(key):
    keys = jax.random.split(key, 10)
    enc_w, enc_p = make_encoder_params(keys[0])

    def lin(k, fan_in, fan_out):
        kw, kb = jax.random.split(k)
        bound = 1.0 / jnp.sqrt(fan_in)
        w = jax.random.uniform(kw, (fan_out, fan_in), jnp.float32, -bound, bound)
        b = jax.random.uniform(kb, (fan_out,), jnp.float32, -bound, bound)
        return w, b

    # input_layer weight is overwritten by encoder.init_layer(), bias keeps Linear init
    _, b_in = lin(keys[1], 3 * NUM_W, INPUT_DIM)
    w_in = init_input_layer_weight(enc_w, enc_p)                    # (INPUT_DIM, 3*NUM_W)
    w1, b1 = lin(keys[2], INPUT_DIM, H_DIM)
    w2, b2 = lin(keys[3], H_DIM, H_DIM)
    w_out, b_out = lin(keys[4], H_DIM, 2 * OUTPUT_DIM)              # output_bypass doubles dim

    return {
        "enc_w": enc_w, "enc_p": enc_p,
        "w_in": w_in, "b_in": b_in,
        "w1": w1, "b1": b1,
        "g1": jnp.ones((H_DIM,), jnp.float32), "be1": jnp.zeros((H_DIM,), jnp.float32),
        "w2": w2, "b2": b2,
        "g2": jnp.ones((H_DIM,), jnp.float32), "be2": jnp.zeros((H_DIM,), jnp.float32),
        "w_out": w_out, "b_out": b_out,
    }


if __name__ == "__main__":
    key = jax.random.PRNGKey(0)
    kp, kt, kl, ki = jax.random.split(key, 4)

    params = make_params(kp)
    packed = prepare_params(params)          # one-time pack/transpose/bf16 cast

    B = 2
    timestep = jax.random.uniform(kt, (B,), jnp.float32, 0.0, 1000.0)
    unet_layer = jax.random.randint(kl, (B,), 0, NUM_UNET_LAYERS).astype(jnp.float32)
    image_embeds = jax.random.normal(ki, (B, IMG_DIM), jnp.float32)

    # small_batch_fallback left at 0 so the Pallas kernel itself runs in this demo.
    fwd = jax.jit(functools.partial(neti_mapper_forward, packed))
    out = fwd(timestep, unet_layer, image_embeds)
    jax.block_until_ready(out)

    word_ref, bypass_ref = reference_forward(params, timestep, unet_layer, image_embeds)
    assert out["word_embedding"].shape == (B, OUTPUT_DIM)
    assert out["bypass_output"].shape == (B, OUTPUT_DIM)
    # Tolerance covers bf16 weight/activation streaming vs. the pure-f32 reference
    # (f32 accumulation + f32 LayerNorm keep the drift well inside this bound).
    assert jnp.allclose(out["word_embedding"], word_ref, atol=5e-2, rtol=5e-2)
    assert jnp.allclose(out["bypass_output"], bypass_ref, atol=5e-2, rtol=5e-2)

    print("KERNEL_OK")
</pallas_src>

<mosaic_0001>
module attributes {stable_mosaic.version = 11 : i64} {
  func.func @neti_mapper_kernel(%arg0: i32, %arg1: memref<2x34xf32, #tpu.memory_space<vmem>>, %arg2: memref<2x32xf32, #tpu.memory_space<vmem>>, %arg3: memref<32x32xf32, #tpu.memory_space<vmem>>, %arg4: memref<96x128xbf16, #tpu.memory_space<vmem>>, %arg5: memref<128x128xbf16, #tpu.memory_space<vmem>>, %arg6: memref<128x256xbf16, #tpu.memory_space<vmem>>, %arg7: memref<8x128xf32, #tpu.memory_space<vmem>>, %arg8: memref<1x256xf32, #tpu.memory_space<vmem>>, %arg9: memref<2x128xf32, #tpu.memory_space<vmem>>, %arg10: memref<2x128xf32, #tpu.memory_space<vmem>>) attributes {dimension_semantics = [#tpu.dimension_semantics<parallel>], iteration_bounds = array<i64: 1>, scalar_prefetch = 0 : i64, scratch_operands = 0 : i64, tpu.core_type = #tpu.core_type<tc>, window_params = [{transform_indices = @transform_0, window_bounds = array<i64: 2, 34>}, {pipeline_mode = #tpu.pipeline_mode<synchronous>, transform_indices = @transform_1, window_bounds = array<i64: 2, 32>}, {pipeline_mode = #tpu.pipeline_mode<synchronous>, transform_indices = @transform_2, window_bounds = array<i64: 32, 32>}, {pipeline_mode = #tpu.pipeline_mode<synchronous>, transform_indices = @transform_3, window_bounds = array<i64: 96, 128>}, {pipeline_mode = #tpu.pipeline_mode<synchronous>, transform_indices = @transform_4, window_bounds = array<i64: 128, 128>}, {pipeline_mode = #tpu.pipeline_mode<synchronous>, transform_indices = @transform_5, window_bounds = array<i64: 128, 256>}, {pipeline_mode = #tpu.pipeline_mode<synchronous>, transform_indices = @transform_6, window_bounds = array<i64: 8, 128>}, {pipeline_mode = #tpu.pipeline_mode<synchronous>, transform_indices = @transform_7, window_bounds = array<i64: 1, 256>}, {transform_indices = @transform_8, window_bounds = array<i64: 2, 128>}, {transform_indices = @transform_9, window_bounds = array<i64: 2, 128>}]} {
    %c0 = arith.constant 0 : index
    %c0_0 = arith.constant 0 : index
    %0 = vector.load %arg1[%c0, %c0_0] : memref<2x34xf32, #tpu.memory_space<vmem>>, vector<2x34xf32>
    %c0_1 = arith.constant 0 : index
    %c0_2 = arith.constant 0 : index
    %1 = vector.load %arg2[%c0_1, %c0_2] : memref<2x32xf32, #tpu.memory_space<vmem>>, vector<2x32xf32>
    %c0_3 = arith.constant 0 : index
    %c0_4 = arith.constant 0 : index
    %2 = vector.load %arg3[%c0_3, %c0_4] : memref<32x32xf32, #tpu.memory_space<vmem>>, vector<32x32xf32>
    %c0_5 = arith.constant 0 : index
    %c0_6 = arith.constant 0 : index
    %3 = vector.load %arg4[%c0_5, %c0_6] : memref<96x128xbf16, #tpu.memory_space<vmem>>, vector<96x128xbf16>
    %c0_7 = arith.constant 0 : index
    %c0_8 = arith.constant 0 : index
    %4 = vector.load %arg5[%c0_7, %c0_8] : memref<128x128xbf16, #tpu.memory_space<vmem>>, vector<128x128xbf16>
    %c0_9 = arith.constant 0 : index
    %c0_10 = arith.constant 0 : index
    %5 = vector.load %arg6[%c0_9, %c0_10] : memref<128x256xbf16, #tpu.memory_space<vmem>>, vector<128x256xbf16>
    %c0_11 = arith.constant 0 : index
    %c0_12 = arith.constant 0 : index
    %6 = vector.load %arg7[%c0_11, %c0_12] : memref<8x128xf32, #tpu.memory_space<vmem>>, vector<8x128xf32>
    %c0_13 = arith.constant 0 : index
    %c0_14 = arith.constant 0 : index
    %7 = vector.load %arg8[%c0_13, %c0_14] : memref<1x256xf32, #tpu.memory_space<vmem>>, vector<1x256xf32>
    %8 = vector.extract_strided_slice %0 {offsets = [0, 0], sizes = [2, 32], strides = [1, 1]} : vector<2x34xf32> to vector<2x32xf32>
    %9 = vector.extract_strided_slice %0 {offsets = [0, 32], sizes = [2, 1], strides = [1, 1]} : vector<2x34xf32> to vector<2x1xf32>
    %10 = vector.extract_strided_slice %0 {offsets = [0, 33], sizes = [2, 1], strides = [1, 1]} : vector<2x34xf32> to vector<2x1xf32>
    %11 = vector.extract_strided_slice %1 {offsets = [0, 0], sizes = [1, 32], strides = [1, 1]} : vector<2x32xf32> to vector<1x32xf32>
    %12 = vector.broadcast %9 : vector<2x1xf32> to vector<2x32xf32>
    %13 = vector.broadcast %11 : vector<1x32xf32> to vector<2x32xf32>
    %14 = arith.mulf %12, %13 : vector<2x32xf32>
    %15 = vector.extract_strided_slice %1 {offsets = [1, 0], sizes = [1, 32], strides = [1, 1]} : vector<2x32xf32> to vector<1x32xf32>
    %16 = vector.broadcast %10 : vector<2x1xf32> to vector<2x32xf32>
    %17 = vector.broadcast %15 : vector<1x32xf32> to vector<2x32xf32>
    %18 = arith.mulf %16, %17 : vector<2x32xf32>
    %19 = arith.addf %14, %18 : vector<2x32xf32>
    %20 = math.sin %19 : vector<2x32xf32>
    %21 = math.cos %19 : vector<2x32xf32>
    %cst = arith.constant dense<0.000000e+00> : vector<2x32xf32>
    %22 = tpu.matmul %8, %2, %cst {dimension_numbers = #tpu.dot_dimension_numbers<[1], [0], [0], [1], [0, 0, 1, 1], [], []>} : vector<2x32xf32>, vector<32x32xf32>, vector<2x32xf32> -> vector<2x32xf32>
    %23 = arith.mulf %20, %20 : vector<2x32xf32>
    %cst_15 = arith.constant dense<0.000000e+00> : vector<2xf32>
    %24 = vector.multi_reduction <add>, %23, %cst_15 [1] : vector<2x32xf32> to vector<2xf32>
    %25 = vector.shape_cast %24 : vector<2xf32> to vector<2x1xf32>
    %26 = arith.mulf %21, %21 : vector<2x32xf32>
    %cst_16 = arith.constant dense<0.000000e+00> : vector<2xf32>
    %27 = vector.multi_reduction <add>, %26, %cst_16 [1] : vector<2x32xf32> to vector<2xf32>
    %28 = vector.shape_cast %27 : vector<2xf32> to vector<2x1xf32>
    %29 = arith.addf %25, %28 : vector<2x1xf32>
    %30 = arith.mulf %22, %22 : vector<2x32xf32>
    %cst_17 = arith.constant dense<0.000000e+00> : vector<2xf32>
    %31 = vector.multi_reduction <add>, %30, %cst_17 [1] : vector<2x32xf32> to vector<2xf32>
    %32 = vector.shape_cast %31 : vector<2xf32> to vector<2x1xf32>
    %33 = arith.addf %29, %32 : vector<2x1xf32>
    %cst_18 = arith.constant 9.99999996E-13 : f32
    %34 = vector.broadcast %cst_18 : f32 to vector<2x1xf32>
    %35 = arith.addf %33, %34 : vector<2x1xf32>
    %36 = math.rsqrt %35 : vector<2x1xf32>
    %37 = arith.truncf %20 : vector<2x32xf32> to vector<2x32xbf16>
    %38 = vector.extract_strided_slice %3 {offsets = [0, 0], sizes = [32, 128], strides = [1, 1]} : vector<96x128xbf16> to vector<32x128xbf16>
    %cst_19 = arith.constant dense<0.000000e+00> : vector<2x128xf32>
    %39 = tpu.matmul %37, %38, %cst_19 {dimension_numbers = #tpu.dot_dimension_numbers<[1], [0], [0], [1], [0, 0, 1, 1], [], []>} : vector<2x32xbf16>, vector<32x128xbf16>, vector<2x128xf32> -> vector<2x128xf32>
    %40 = arith.truncf %21 : vector<2x32xf32> to vector<2x32xbf16>
    %41 = vector.extract_strided_slice %3 {offsets = [32, 0], sizes = [32, 128], strides = [1, 1]} : vector<96x128xbf16> to vector<32x128xbf16>
    %cst_20 = arith.constant dense<0.000000e+00> : vector<2x128xf32>
    %42 = tpu.matmul %40, %41, %cst_20 {dimension_numbers = #tpu.dot_dimension_numbers<[1], [0], [0], [1], [0, 0, 1, 1], [], []>} : vector<2x32xbf16>, vector<32x128xbf16>, vector<2x128xf32> -> vector<2x128xf32>
    %43 = arith.addf %39, %42 : vector<2x128xf32>
    %44 = arith.truncf %22 : vector<2x32xf32> to vector<2x32xbf16>
    %45 = vector.extract_strided_slice %3 {offsets = [64, 0], sizes = [32, 128], strides = [1, 1]} : vector<96x128xbf16> to vector<32x128xbf16>
    %cst_21 = arith.constant dense<0.000000e+00> : vector<2x128xf32>
    %46 = tpu.matmul %44, %45, %cst_21 {dimension_numbers = #tpu.dot_dimension_numbers<[1], [0], [0], [1], [0, 0, 1, 1], [], []>} : vector<2x32xbf16>, vector<32x128xbf16>, vector<2x128xf32> -> vector<2x128xf32>
    %47 = arith.addf %43, %46 : vector<2x128xf32>
    %48 = vector.broadcast %36 : vector<2x1xf32> to vector<2x128xf32>
    %49 = arith.mulf %47, %48 : vector<2x128xf32>
    %50 = vector.extract_strided_slice %6 {offsets = [0, 0], sizes = [1, 128], strides = [1, 1]} : vector<8x128xf32> to vector<1x128xf32>
    %51 = vector.broadcast %50 : vector<1x128xf32> to vector<2x128xf32>
    %52 = arith.addf %49, %51 : vector<2x128xf32>
    %53 = vector.extract_strided_slice %6 {offsets = [1, 0], sizes = [1, 128], strides = [1, 1]} : vector<8x128xf32> to vector<1x128xf32>
    %54 = vector.extract_strided_slice %6 {offsets = [2, 0], sizes = [1, 128], strides = [1, 1]} : vector<8x128xf32> to vector<1x128xf32>
    %cst_22 = arith.constant dense<0.000000e+00> : vector<2xf32>
    %55 = vector.multi_reduction <add>, %52, %cst_22 [1] : vector<2x128xf32> to vector<2xf32>
    %56 = vector.shape_cast %55 : vector<2xf32> to vector<2x1xf32>
    %cst_23 = arith.constant 1.280000e+02 : f32
    %57 = vector.broadcast %cst_23 : f32 to vector<2x1xf32>
    %58 = arith.divf %56, %57 : vector<2x1xf32>
    %59 = vector.broadcast %58 : vector<2x1xf32> to vector<2x128xf32>
    %60 = arith.subf %52, %59 : vector<2x128xf32>
    %61 = arith.mulf %60, %60 : vector<2x128xf32>
    %cst_24 = arith.constant dense<0.000000e+00> : vector<2xf32>
    %62 = vector.multi_reduction <add>, %61, %cst_24 [1] : vector<2x128xf32> to vector<2xf32>
    %63 = vector.shape_cast %62 : vector<2xf32> to vector<2x1xf32>
    %cst_25 = arith.constant 1.280000e+02 : f32
    %64 = vector.broadcast %cst_25 : f32 to vector<2x1xf32>
    %65 = arith.divf %63, %64 : vector<2x1xf32>
    %66 = vector.broadcast %58 : vector<2x1xf32> to vector<2x128xf32>
    %67 = arith.subf %52, %66 : vector<2x128xf32>
    %cst_26 = arith.constant 9.99999974E-6 : f32
    %68 = vector.broadcast %cst_26 : f32 to vector<2x1xf32>
    %69 = arith.addf %65, %68 : vector<2x1xf32>
    %70 = math.rsqrt %69 : vector<2x1xf32>
    %71 = vector.broadcast %70 : vector<2x1xf32> to vector<2x128xf32>
    %72 = arith.mulf %67, %71 : vector<2x128xf32>
    %73 = vector.broadcast %53 : vector<1x128xf32> to vector<2x128xf32>
    %74 = arith.mulf %72, %73 : vector<2x128xf32>
    %75 = vector.broadcast %54 : vector<1x128xf32> to vector<2x128xf32>
    %76 = arith.addf %74, %75 : vector<2x128xf32>
    %cst_27 = arith.constant 0.000000e+00 : f32
    %77 = vector.broadcast %cst_27 : f32 to vector<2x128xf32>
    %78 = arith.cmpf oge, %76, %77 : vector<2x128xf32>
    %cst_28 = arith.constant 0.00999999977 : f32
    %79 = vector.broadcast %cst_28 : f32 to vector<2x128xf32>
    %80 = arith.mulf %79, %76 : vector<2x128xf32>
    %81 = arith.select %78, %76, %80 : vector<2x128xi1>, vector<2x128xf32>
    %82 = arith.truncf %81 : vector<2x128xf32> to vector<2x128xbf16>
    %cst_29 = arith.constant dense<0.000000e+00> : vector<2x128xf32>
    %83 = tpu.matmul %82, %4, %cst_29 {dimension_numbers = #tpu.dot_dimension_numbers<[1], [0], [0], [1], [0, 0, 1, 1], [], []>} : vector<2x128xbf16>, vector<128x128xbf16>, vector<2x128xf32> -> vector<2x128xf32>
    %84 = vector.extract_strided_slice %6 {offsets = [3, 0], sizes = [1, 128], strides = [1, 1]} : vector<8x128xf32> to vector<1x128xf32>
    %85 = vector.broadcast %84 : vector<1x128xf32> to vector<2x128xf32>
    %86 = arith.addf %83, %85 : vector<2x128xf32>
    %87 = vector.extract_strided_slice %6 {offsets = [4, 0], sizes = [1, 128], strides = [1, 1]} : vector<8x128xf32> to vector<1x128xf32>
    %88 = vector.extract_strided_slice %6 {offsets = [5, 0], sizes = [1, 128], strides = [1, 1]} : vector<8x128xf32> to vector<1x128xf32>
    %cst_30 = arith.constant dense<0.000000e+00> : vector<2xf32>
    %89 = vector.multi_reduction <add>, %86, %cst_30 [1] : vector<2x128xf32> to vector<2xf32>
    %90 = vector.shape_cast %89 : vector<2xf32> to vector<2x1xf32>
    %cst_31 = arith.constant 1.280000e+02 : f32
    %91 = vector.broadcast %cst_31 : f32 to vector<2x1xf32>
    %92 = arith.divf %90, %91 : vector<2x1xf32>
    %93 = vector.broadcast %92 : vector<2x1xf32> to vector<2x128xf32>
    %94 = arith.subf %86, %93 : vector<2x128xf32>
    %95 = arith.mulf %94, %94 : vector<2x128xf32>
    %cst_32 = arith.constant dense<0.000000e+00> : vector<2xf32>
    %96 = vector.multi_reduction <add>, %95, %cst_32 [1] : vector<2x128xf32> to vector<2xf32>
    %97 = vector.shape_cast %96 : vector<2xf32> to vector<2x1xf32>
    %cst_33 = arith.constant 1.280000e+02 : f32
    %98 = vector.broadcast %cst_33 : f32 to vector<2x1xf32>
    %99 = arith.divf %97, %98 : vector<2x1xf32>
    %100 = vector.broadcast %92 : vector<2x1xf32> to vector<2x128xf32>
    %101 = arith.subf %86, %100 : vector<2x128xf32>
    %cst_34 = arith.constant 9.99999974E-6 : f32
    %102 = vector.broadcast %cst_34 : f32 to vector<2x1xf32>
    %103 = arith.addf %99, %102 : vector<2x1xf32>
    %104 = math.rsqrt %103 : vector<2x1xf32>
    %105 = vector.broadcast %104 : vector<2x1xf32> to vector<2x128xf32>
    %106 = arith.mulf %101, %105 : vector<2x128xf32>
    %107 = vector.broadcast %87 : vector<1x128xf32> to vector<2x128xf32>
    %108 = arith.mulf %106, %107 : vector<2x128xf32>
    %109 = vector.broadcast %88 : vector<1x128xf32> to vector<2x128xf32>
    %110 = arith.addf %108, %109 : vector<2x128xf32>
    %cst_35 = arith.constant 0.000000e+00 : f32
    %111 = vector.broadcast %cst_35 : f32 to vector<2x128xf32>
    %112 = arith.cmpf oge, %110, %111 : vector<2x128xf32>
    %cst_36 = arith.constant 0.00999999977 : f32
    %113 = vector.broadcast %cst_36 : f32 to vector<2x128xf32>
    %114 = arith.mulf %113, %110 : vector<2x128xf32>
    %115 = arith.select %112, %110, %114 : vector<2x128xi1>, vector<2x128xf32>
    %116 = arith.truncf %115 : vector<2x128xf32> to vector<2x128xbf16>
    %cst_37 = arith.constant dense<0.000000e+00> : vector<2x256xf32>
    %117 = tpu.matmul %116, %5, %cst_37 {dimension_numbers = #tpu.dot_dimension_numbers<[1], [0], [0], [1], [0, 0, 1, 1], [], []>} : vector<2x128xbf16>, vector<128x256xbf16>, vector<2x256xf32> -> vector<2x256xf32>
    %118 = vector.broadcast %7 : vector<1x256xf32> to vector<2x256xf32>
    %119 = arith.addf %117, %118 : vector<2x256xf32>
    %120 = vector.extract_strided_slice %119 {offsets = [0, 0], sizes = [2, 128], strides = [1, 1]} : vector<2x256xf32> to vector<2x128xf32>
    %121 = vector.extract_strided_slice %119 {offsets = [0, 128], sizes = [2, 128], strides = [1, 1]} : vector<2x256xf32> to vector<2x128xf32>
    %c0_38 = arith.constant 0 : index
    %c0_39 = arith.constant 0 : index
    %122 = vector.load %arg9[%c0_38, %c0_39] : memref<2x128xf32, #tpu.memory_space<vmem>>, vector<2x128xf32>
    tpu.vector_store %arg9[%c0_38, %c0_39], %120 {strides = array<i32>} : memref<2x128xf32, #tpu.memory_space<vmem>>, vector<2x128xf32>,
    %c0_40 = arith.constant 0 : index
    %c0_41 = arith.constant 0 : index
    %123 = vector.load %arg10[%c0_40, %c0_41] : memref<2x128xf32, #tpu.memory_space<vmem>>, vector<2x128xf32>
    tpu.vector_store %arg10[%c0_40, %c0_41], %121 {strides = array<i32>} : memref<2x128xf32, #tpu.memory_space<vmem>>, vector<2x128xf32>,
    return
  }
  func.func @transform_0(%arg0: i32) -> (i32, i32) {
    %c0_i32 = arith.constant 0 : i32
    %c0_i32_0 = arith.constant 0 : i32
    return %arg0, %c0_i32 : i32, i32
  }
  func.func @transform_1(%arg0: i32) -> (i32, i32) {
    %c0_i32 = arith.constant 0 : i32
    %c0_i32_0 = arith.constant 0 : i32
    %c0_i32_1 = arith.constant 0 : i32
    return %c0_i32, %c0_i32_0 : i32, i32
  }
  func.func @transform_2(%arg0: i32) -> (i32, i32) {
    %c0_i32 = arith.constant 0 : i32
    %c0_i32_0 = arith.constant 0 : i32
    %c0_i32_1 = arith.constant 0 : i32
    return %c0_i32, %c0_i32_0 : i32, i32
  }
  func.func @transform_3(%arg0: i32) -> (i32, i32) {
    %c0_i32 = arith.constant 0 : i32
    %c0_i32_0 = arith.constant 0 : i32
    %c0_i32_1 = arith.constant 0 : i32
    return %c0_i32, %c0_i32_0 : i32, i32
  }
  func.func @transform_4(%arg0: i32) -> (i32, i32) {
    %c0_i32 = arith.constant 0 : i32
    %c0_i32_0 = arith.constant 0 : i32
    %c0_i32_1 = arith.constant 0 : i32
    return %c0_i32, %c0_i32_0 : i32, i32
  }
  func.func @transform_5(%arg0: i32) -> (i32, i32) {
    %c0_i32 = arith.constant 0 : i32
    %c0_i32_0 = arith.constant 0 : i32
    %c0_i32_1 = arith.constant 0 : i32
    return %c0_i32, %c0_i32_0 : i32, i32
  }
  func.func @transform_6(%arg0: i32) -> (i32, i32) {
    %c0_i32 = arith.constant 0 : i32
    %c0_i32_0 = arith.constant 0 : i32
    %c0_i32_1 = arith.constant 0 : i32
    return %c0_i32, %c0_i32_0 : i32, i32
  }
  func.func @transform_7(%arg0: i32) -> (i32, i32) {
    %c0_i32 = arith.constant 0 : i32
    %c0_i32_0 = arith.constant 0 : i32
    %c0_i32_1 = arith.constant 0 : i32
    return %c0_i32, %c0_i32_0 : i32, i32
  }
  func.func @transform_8(%arg0: i32) -> (i32, i32) {
    %c0_i32 = arith.constant 0 : i32
    %c0_i32_0 = arith.constant 0 : i32
    return %arg0, %c0_i32 : i32, i32
  }
  func.func @transform_9(%arg0: i32) -> (i32, i32) {
    %c0_i32 = arith.constant 0 : i32
    %c0_i32_0 = arith.constant 0 : i32
    return %arg0, %c0_i32 : i32, i32
  }
}

</mosaic_0001>

<llo_original>
// kernel: neti_mapper_forward.1
$region0: #{neti_mapper_forward.1}
  #allocation0 [shape = 'u32[]', space=smem, size = 0x4, offset = 0x4, fixed_abs, tag = 'smem constant byte address 0x4 - core index']
  #allocation1 [shape = 'u32[144,128]{1,0:T(1,128)}', space=vmem, size = 0x12000, scoped, tag = 'internal scratch']
  %s0 = inlined_call_operand.vmem [shape: f32[2,34], index: 0, kind: input, shape index: {}]
  %s1 = inlined_call_operand.vmem [shape: f32[2,32], index: 1, kind: input, shape index: {}]
  %s2 = inlined_call_operand.vmem [shape: f32[32,32], index: 2, kind: input, shape index: {}]
  %s3 = inlined_call_operand.vmem [shape: bf16[96,128], index: 3, kind: input, shape index: {}]
  %s4 = inlined_call_operand.vmem [shape: bf16[128,128], index: 4, kind: input, shape index: {}]
  %s5 = inlined_call_operand.vmem [shape: bf16[128,256], index: 5, kind: input, shape index: {}]
  %s6 = inlined_call_operand.vmem [shape: f32[8,128], index: 6, kind: input, shape index: {}]
  %s7 = inlined_call_operand.vmem [shape: f32[1,256], index: 7, kind: input, shape index: {}]
  %s8 = inlined_call_operand.hbm [shape: f32[2,128], index: 8, kind: output, shape index: {0}]
  %s9 = inlined_call_operand.hbm [shape: f32[2,128], index: 9, kind: output, shape index: {1}]
  %10 = xla_tuple %s8, %s9
  %s11 = sld [smem:[#allocation0]]
  $region50: #{neti_mapper_forward.1} parent=0
    _
  %s13 = ssub.s32 1, %s11
  %s14 = scalar_select 0, %s13, %s11
  $region1: #{neti_mapper_forward.1} parent=0
    #allocation2 [shape = 'u8[1024]{0}', space=vmem, size = 0x400, scoped, tag = 'output window, operand 0, single buffered']
    #allocation3 [shape = 's32[1]{0}', space=sflag, size = 0x4, scoped, tag = 'scoped memory for neti_mapper_forward.1']
    #allocation4 [shape = 'u8[1024]{0}', space=vmem, size = 0x400, scoped, tag = 'output window, operand 1, single buffered']
    #allocation5 [shape = 's32[1]{0}', space=sflag, size = 0x4, scoped, tag = 'scoped memory for neti_mapper_forward.1']
    %15 = vsyncpa [#allocation3], 0
    %16 = vsyncpa [#allocation5], 0
    // Predicated region
    $region2: #{neti_mapper_forward.1} parent=1 // pred_check
      _
    $region3: #{neti_mapper_forward.1} parent=1 // pred_check_branch
      %18 = sbr.rel (0) target = $region5
    $region4: #{neti_mapper_forward.1} parent=1 // pred_region
      _
    $region5: #{neti_mapper_forward.1} parent=1 // pred_fallthru
      _
    // Predicated region
    $region6: #{neti_mapper_forward.1} parent=1 // pred_check
      _
    $region7: #{neti_mapper_forward.1} parent=1 // pred_check_branch
      %20 = sbr.rel (0) target = $region9
    $region8: #{neti_mapper_forward.1} parent=1 // pred_region
      _
    $region9: #{neti_mapper_forward.1} parent=1 // pred_fallthru
      _
    // Predicated region
    $region10: #{neti_mapper_forward.1} parent=1 // pred_check
      _
    $region11: #{neti_mapper_forward.1} parent=1 // pred_check_branch
      %22 = sbr.rel (0) target = $region13
    $region12: #{neti_mapper_forward.1} parent=1 // pred_region
      _
    $region13: #{neti_mapper_forward.1} parent=1 // pred_fallthru
      _
    // Predicated region
    $region14: #{neti_mapper_forward.1} parent=1 // pred_check
      _
    $region15: #{neti_mapper_forward.1} parent=1 // pred_check_branch
      %24 = sbr.rel (0) target = $region17
    $region16: #{neti_mapper_forward.1} parent=1 // pred_region
      _
    $region17: #{neti_mapper_forward.1} parent=1 // pred_fallthru
      _
    // Predicated region
    $region18: #{neti_mapper_forward.1} parent=1 // pred_check
      _
    $region19: #{neti_mapper_forward.1} parent=1 // pred_check_branch
      %26 = sbr.rel (0) target = $region21
    $region20: #{neti_mapper_forward.1} parent=1 // pred_region
      _
    $region21: #{neti_mapper_forward.1} parent=1 // pred_fallthru
      _
    // Predicated region
    $region22: #{neti_mapper_forward.1} parent=1 // pred_check
      _
    $region23: #{neti_mapper_forward.1} parent=1 // pred_check_branch
      %28 = sbr.rel (0) target = $region25
    $region24: #{neti_mapper_forward.1} parent=1 // pred_region
      _
    $region25: #{neti_mapper_forward.1} parent=1 // pred_fallthru
      _
    // Predicated region
    $region26: #{neti_mapper_forward.1} parent=1 // pred_check
      _
    $region27: #{neti_mapper_forward.1} parent=1 // pred_check_branch
      %30 = sbr.rel (0) target = $region29
    $region28: #{neti_mapper_forward.1} parent=1 // pred_region
      _
    $region29: #{neti_mapper_forward.1} parent=1 // pred_fallthru
      _
    // Predicated region
    $region30: #{neti_mapper_forward.1} parent=1 // pred_check
      _
    $region31: #{neti_mapper_forward.1} parent=1 // pred_check_branch
      %32 = sbr.rel (0) target = $region33
    $region32: #{neti_mapper_forward.1} parent=1 // pred_region
      _
    $region33: #{neti_mapper_forward.1} parent=1 // pred_fallthru
      _
    %v34 = vld [vmem:[%s0] sm:$0x3]
    %v35 = vld [vmem:[%s1] sm:$0x3]
    %v36 = vld [vmem:[%s2] sm:$0xff]
    %v37 = vld [vmem:[%s2 + $0x8] sm:$0xff]
    %v38 = vld [vmem:[%s2 + $0x10] sm:$0xff]
    %v39 = vld [vmem:[%s2 + $0x18] sm:$0xff]
    %v40 = vld [vmem:[%s3] sm:$0xf]
    %v41 = vld [vmem:[%s3 + $0x4] sm:$0xf]
    %v42 = vld [vmem:[%s3 + $0x8] sm:$0xf]
    %v43 = vld [vmem:[%s3 + $0xc] sm:$0xf]
    %v44 = vld [vmem:[%s3 + $0x10] sm:$0xf]
    %v45 = vld [vmem:[%s3 + $0x14] sm:$0xf]
    %v46 = vld [vmem:[%s3 + $0x18] sm:$0xf]
    %v47 = vld [vmem:[%s3 + $0x1c] sm:$0xf]
    %v48 = vld [vmem:[%s3 + $0x20] sm:$0xf]
    %v49 = vld [vmem:[%s3 + $0x24] sm:$0xf]
    %v50 = vld [vmem:[%s3 + $0x28] sm:$0xf]
    %v51 = vld [vmem:[%s3 + $0x2c] sm:$0xf]
    %v52 = vld [vmem:[%s4] sm:$0xf]
    %v53 = vld [vmem:[%s4 + $0x4] sm:$0xf]
    %v54 = vld [vmem:[%s4 + $0x8] sm:$0xf]
    %v55 = vld [vmem:[%s4 + $0xc] sm:$0xf]
    %v56 = vld [vmem:[%s4 + $0x10] sm:$0xf]
    %v57 = vld [vmem:[%s4 + $0x14] sm:$0xf]
    %v58 = vld [vmem:[%s4 + $0x18] sm:$0xf]
    %v59 = vld [vmem:[%s4 + $0x1c] sm:$0xf]
    %v60 = vld [vmem:[%s4 + $0x20] sm:$0xf]
    %v61 = vld [vmem:[%s4 + $0x24] sm:$0xf]
    %v62 = vld [vmem:[%s4 + $0x28] sm:$0xf]
    %v63 = vld [vmem:[%s4 + $0x2c] sm:$0xf]
    %v64 = vld [vmem:[%s4 + $0x30] sm:$0xf]
    %v65 = vld [vmem:[%s4 + $0x34] sm:$0xf]
    %v66 = vld [vmem:[%s4 + $0x38] sm:$0xf]
    %v67 = vld [vmem:[%s4 + $0x3c] sm:$0xf]
    %v68 = vld [vmem:[%s5] sm:$0xff]
    %v69 = vld [vmem:[%s5 + $0x8] sm:$0xff]
    %v70 = vld [vmem:[%s5 + $0x10] sm:$0xff]
    %v71 = vld [vmem:[%s5 + $0x18] sm:$0xff]
    %v72 = vld [vmem:[%s5 + $0x20] sm:$0xff]
    %v73 = vld [vmem:[%s5 + $0x28] sm:$0xff]
    %v74 = vld [vmem:[%s5 + $0x30] sm:$0xff]
    %v75 = vld [vmem:[%s5 + $0x38] sm:$0xff]
    %v76 = vld [vmem:[%s5 + $0x40] sm:$0xff]
    %v77 = vld [vmem:[%s5 + $0x48] sm:$0xff]
    %v78 = vld [vmem:[%s5 + $0x50] sm:$0xff]
    %v79 = vld [vmem:[%s5 + $0x58] sm:$0xff]
    %v80 = vld [vmem:[%s5 + $0x60] sm:$0xff]
    %v81 = vld [vmem:[%s5 + $0x68] sm:$0xff]
    %v82 = vld [vmem:[%s5 + $0x70] sm:$0xff]
    %v83 = vld [vmem:[%s5 + $0x78] sm:$0xff]
    %v84 = vld [vmem:[%s6] sm:$0xff]
    %v85 = vld [vmem:[%s7] sm:$0x3]
    %87 = vset.pattern.permute.xlu0 32
    %88 = vperm.xlu0 %87, %v34
    %v89 = vpop.permute.xlu0 %88
    %v91 = vlaneseq
    %v92 = vshrl.u32 %v91, 7
    %v93 = vsub.s32 0, %v92
    %v94 = vrot.slane %v35, %v93
    %v95 = vmul.f32 %v89, %v94
    %96 = vset.pattern.permute.xlu0 33
    %97 = vperm.xlu0 %96, %v34
    %v98 = vpop.permute.xlu0 %97
    %v100 = vlaneseq
    %v101 = vshrl.u32 %v100, 7
    %v102 = vsub.s32 1, %v101
    %v103 = vrot.slane %v35, %v102
    %v104 = vmul.f32 %v98, %v103
    %v105 = vadd.f32 %v95, %v104
    %v106 = vand.u32 2147483647, %v105
    %vm107 = vcmp.le.f32.partialorder %v106, 0.7853982
    %vm108 = vcmp.lt.s32.totalorder %v105, 0
    %v109 = vand.u32 %v105, 2139095040
    %v110 = vshrl.u32 %v109, 23
    %v111 = vsub.s32 %v110, 127
    %v112 = vand.u32 2147483647, %v105
    %v113 = vand.u32 %v112, 8388607
    %v114 = vor.u32 %v113, 8388608
    %v115 = vsub.s32 0, %v114
    %v116 = vadd.s32 %v111, 1
    %vm117 = vcmp.gt.s32.totalorder %v116, 0
    %v118 = vsel %vm117, %v116, 0
    %v119 = vshrl.u32 %v118, 5
    %v120 = vand.u32 %v118, 31
    %v121 = vsub.s32 32, %v120
    %v122 = vshrl.u32 683565275, %v121
    %v123 = vshll.u32 683565275, %v120
    %v124 = vshrl.u32 2475754826, %v121
    %v125 = vor.u32 %v123, %v124
    %v126 = vshll.u32 2475754826, %v120
    %v127 = vshrl.u32 2131351028, %v121
    %v128 = vor.u32 %v126, %v127
    %v129 = vshll.u32 2131351028, %v120
    %v130 = vshrl.u32 2102212464, %v121
    %v131 = vor.u32 %v129, %v130
    %v132 = vshll.u32 2102212464, %v120
    %v133 = vshrl.u32 920167782, %v121
    %v134 = vor.u32 %v132, %v133
    %v135 = vshll.u32 920167782, %v120
    %v136 = vshrl.u32 1326507024, %v121
    %v137 = vor.u32 %v135, %v136
    %vm138 = vcmp.lt.s32.totalorder %v119, 1
    %vm139 = vcmp.lt.s32.totalorder %v119, 2
    %vm140 = vcmp.lt.s32.totalorder %v119, 3
    %vm141 = vcmp.lt.s32.totalorder %v119, 4
    %v142 = vsel %vm138, %v122, %v125
    %v143 = vsel %vm141, %v131, 2102212464
    %v144 = vsel %vm140, %v128, %v143
    %v145 = vsel %vm139, %v142, %v144
    %v146 = vsel %vm138, %v125, %v128
    %v147 = vsel %vm141, %v134, 920167782
    %v148 = vsel %vm140, %v131, %v147
    %v149 = vsel %vm139, %v146, %v148
    %v150 = vsel %vm138, %v128, %v131
    %v151 = vsel %vm141, %v137, 1326507024
    %v152 = vsel %vm140, %v134, %v151
    %v153 = vsel %vm139, %v150, %v152
    %v154 = vshll.u32 %v114, 8
    %v155 = vmul.u32.u64.compose %v154, %v153
    %v156 = vextract.low.u32 %v155
    %v157 = vextract.high.u32 %v155
    %v158 = vmul.u32.u64.compose %v154, %v149
    %v159 = vextract.low.u32 %v158
    %v160 = vextract.high.u32 %v158
    %v161 = vmul.u32 %v154, %v145
    %v162 = vadd.s32 %v157, %v159
    %vm163 = vc.u32 %v157, %v159
    %v164 = vadd.s32 %v160, 1
    %v165 = vsel %vm163, %v164, %v160
    %v166 = vadd.s32 %v161, %v165
    %v167 = vadd.s32 %v166, 536870912
    %v168 = vshrl.u32 %v167, 30
    %v169 = vshll.u32 %v168, 30
    %v170 = vsub.s32 %v166, %v169
    %vm171 = vcmp.lt.s32.totalorder %v170, 0
    %v172 = vsub.s32 0, %v170
    %v173 = vsel %vm171, %v172, %v170
    %v174 = vclz %v173
    %v175 = vsub.s32 %v174, 2
    %vm176 = vcmp.gt.s32.totalorder 0, %v175
    %v177 = vsel %vm176, 0, %v175
    %v178 = vsub.s32 32, %v177
    %v179 = vshll.u32 %v170, %v177
    %v180 = vshrl.u32 %v162, %v178
    %v181 = vor.u32 %v179, %v180
    %v182 = vsub.s32 4294967266, %v177
    %v183 = vadd.s32 %v182, 127
    %v184 = vshll.u32 %v183, 23
    %v185 = vor.u32 4788187, %v184
    %v186 = vand.u32 2147483647, %v185
    %v188 = vcvt.s32.f32 %v181
    %v189 = vmul.f32 %v188, %v186
    %v190 = vxor.u32 %v189, 2147483648
    %v191 = vsel %vm108, %v190, %v189
    %v192 = vsub.s32 4, %v168
    %v193 = vsel %vm108, %v192, %v168
    %v194 = vsel %vm107, %v105, %v191
    %v195 = vsel %vm107, 0, %v193
    %v196 = vcosq.f32.pop %v194
    %v197 = vsinq.f32.pop %v194
    %vm198 = vweird.f32 %v105
    %v199 = vadd.s32 %v195, 3
    %v200 = vand.u32 %v199, 3
    %vm201 = vcmp.lt.s32.totalorder %v200, 2
    %vm202 = vcmp.eq.s32.totalorder %v200, 0
    %v203 = vxor.u32 %v197, 2147483648
    %v204 = vsel %vm202, %v196, %v203
    %vm205 = vcmp.eq.s32.totalorder %v200, 2
    %v206 = vxor.u32 %v196, 2147483648
    %v207 = vsel %vm205, %v206, %v197
    %v208 = vsel %vm201, %v204, %v207
    %v209 = vsel %vm198, nan, %v208
    %v210 = vand.u32 2147483647, %v105
    %vm211 = vcmp.le.f32.partialorder %v210, 0.7853982
    %vm212 = vcmp.lt.s32.totalorder %v105, 0
    %v213 = vand.u32 %v105, 2139095040
    %v214 = vshrl.u32 %v213, 23
    %v215 = vsub.s32 %v214, 127
    %v216 = vand.u32 2147483647, %v105
    %v217 = vand.u32 %v216, 8388607
    %v218 = vor.u32 %v217, 8388608
    %v219 = vsub.s32 0, %v218
    %v220 = vadd.s32 %v215, 1
    %vm221 = vcmp.gt.s32.totalorder %v220, 0
    %v222 = vsel %vm221, %v220, 0
    %v223 = vshrl.u32 %v222, 5
    %v224 = vand.u32 %v222, 31
    %v225 = vsub.s32 32, %v224
    %v226 = vshrl.u32 683565275, %v225
    %v227 = vshll.u32 683565275, %v224
    %v228 = vshrl.u32 2475754826, %v225
    %v229 = vor.u32 %v227, %v228
    %v230 = vshll.u32 2475754826, %v224
    %v231 = vshrl.u32 2131351028, %v225
    %v232 = vor.u32 %v230, %v231
    %v233 = vshll.u32 2131351028, %v224
    %v234 = vshrl.u32 2102212464, %v225
    %v235 = vor.u32 %v233, %v234
    %v236 = vshll.u32 2102212464, %v224
    %v237 = vshrl.u32 920167782, %v225
    %v238 = vor.u32 %v236, %v237
    %v239 = vshll.u32 920167782, %v224
    %v240 = vshrl.u32 1326507024, %v225
    %v241 = vor.u32 %v239, %v240
    %vm242 = vcmp.lt.s32.totalorder %v223, 1
    %vm243 = vcmp.lt.s32.totalorder %v223, 2
    %vm244 = vcmp.lt.s32.totalorder %v223, 3
    %vm245 = vcmp.lt.s32.totalorder %v223, 4
    %v246 = vsel %vm242, %v226, %v229
    %v247 = vsel %vm245, %v235, 2102212464
    %v248 = vsel %vm244, %v232, %v247
    %v249 = vsel %vm243, %v246, %v248
    %v250 = vsel %vm242, %v229, %v232
    %v251 = vsel %vm245, %v238, 920167782
    %v252 = vsel %vm244, %v235, %v251
    %v253 = vsel %vm243, %v250, %v252
    %v254 = vsel %vm242, %v232, %v235
    %v255 = vsel %vm245, %v241, 1326507024
    %v256 = vsel %vm244, %v238, %v255
    %v257 = vsel %vm243, %v254, %v256
    %v258 = vshll.u32 %v218, 8
    %v259 = vmul.u32.u64.compose %v258, %v257
    %v260 = vextract.low.u32 %v259
    %v261 = vextract.high.u32 %v259
    %v262 = vmul.u32.u64.compose %v258, %v253
    %v263 = vextract.low.u32 %v262
    %v264 = vextract.high.u32 %v262
    %v265 = vmul.u32 %v258, %v249
    %v266 = vadd.s32 %v261, %v263
    %vm267 = vc.u32 %v261, %v263
    %v268 = vadd.s32 %v264, 1
    %v269 = vsel %vm267, %v268, %v264
    %v270 = vadd.s32 %v265, %v269
    %v271 = vadd.s32 %v270, 536870912
    %v272 = vshrl.u32 %v271, 30
    %v273 = vshll.u32 %v272, 30
    %v274 = vsub.s32 %v270, %v273
    %vm275 = vcmp.lt.s32.totalorder %v274, 0
    %v276 = vsub.s32 0, %v274
    %v277 = vsel %vm275, %v276, %v274
    %v278 = vclz %v277
    %v279 = vsub.s32 %v278, 2
    %vm280 = vcmp.gt.s32.totalorder 0, %v279
    %v281 = vsel %vm280, 0, %v279
    %v282 = vsub.s32 32, %v281
    %v283 = vshll.u32 %v274, %v281
    %v284 = vshrl.u32 %v266, %v282
    %v285 = vor.u32 %v283, %v284
    %v286 = vsub.s32 4294967266, %v281
    %v287 = vadd.s32 %v286, 127
    %v288 = vshll.u32 %v287, 23
    %v289 = vor.u32 4788187, %v288
    %v290 = vand.u32 2147483647, %v289
    %v292 = vcvt.s32.f32 %v285
    %v293 = vmul.f32 %v292, %v290
    %v294 = vxor.u32 %v293, 2147483648
    %v295 = vsel %vm212, %v294, %v293
    %v296 = vsub.s32 4, %v272
    %v297 = vsel %vm212, %v296, %v272
    %v298 = vsel %vm211, %v105, %v295
    %v299 = vsel %vm211, 0, %v297
    %v300 = vcosq.f32.pop %v298
    %v301 = vsinq.f32.pop %v298
    %vm302 = vweird.f32 %v105
    %v303 = vand.u32 %v299, 3
    %vm304 = vcmp.lt.s32.totalorder %v303, 2
    %vm305 = vcmp.eq.s32.totalorder %v303, 0
    %v306 = vxor.u32 %v301, 2147483648
    %v307 = vsel %vm305, %v300, %v306
    %vm308 = vcmp.eq.s32.totalorder %v303, 2
    %v309 = vxor.u32 %v300, 2147483648
    %v310 = vsel %vm308, %v309, %v301
    %v311 = vsel %vm304, %v307, %v310
    %v312 = vsel %vm302, nan, %v311
    %vm313 = vcmask 261120
    %v314 = vsel %vm313, %v34, 0
    %316 = vmatprep.subr.mxu0 0.0
    %317 = vmatpush1.msra.mxu0 %v36
    %318 = vmatprep.subr.mxu0 0.0
    %319 = vmatpush1.msra.mxu0 %v37
    %320 = vmatprep.subr.mxu0 0.0
    %321 = vmatpush1.msra.mxu0 %v38
    %322 = vmatprep.subr.mxu0 0.0
    %323 = vmatpush1.msra.mxu0 %v39
    %324 = vmatprep.subr.mxu0 0.0
    %325 = vmatpush1.msra.mxu0 0.0
    %326 = vmatprep.subr.mxu0 0.0
    %327 = vmatpush1.msra.mxu0 0.0
    %328 = vmatprep.subr.mxu0 0.0
    %329 = vmatpush1.msra.mxu0 0.0
    %330 = vmatprep.subr.mxu0 0.0
    %331 = vmatpush1.msra.mxu0 0.0
    %332 = vmatprep.subr.mxu0 0.0
    %333 = vmatpush1.msra.mxu0 0.0
    %334 = vmatprep.subr.mxu0 0.0
    %335 = vmatpush1.msra.mxu0 0.0
    %336 = vmatprep.subr.mxu0 0.0
    %337 = vmatpush1.msra.mxu0 0.0
    %338 = vmatprep.subr.mxu0 0.0
    %339 = vmatpush1.msra.mxu0 0.0
    %340 = vmatprep.subr.mxu0 0.0
    %341 = vmatpush1.msra.mxu0 0.0
    %342 = vmatprep.subr.mxu0 0.0
    %343 = vmatpush1.msra.mxu0 0.0
    %344 = vmatprep.subr.mxu0 0.0
    %345 = vmatpush1.msra.mxu0 0.0
    %346 = vmatprep.subr.mxu0 0.0
    %347 = vmatpush1.msra.mxu0 0.0
    %348 = vmatprep.subr.mxu0 0.0
    %349 = vmatpush1.msra.mxu0 0.0
    %350 = vmatprep.subr.mxu0 0.0
    %351 = vmatpush1.msra.mxu0 0.0
    %352 = vmatprep.subr.mxu0 0.0
    %353 = vmatpush1.msra.mxu0 0.0
    %354 = vmatprep.subr.mxu0 0.0
    %355 = vmatpush1.msra.mxu0 0.0
    %356 = vmatprep.subr.mxu0 0.0
    %357 = vmatpush1.msra.mxu0 0.0
    %358 = vmatprep.subr.mxu0 0.0
    %359 = vmatpush1.msra.mxu0 0.0
    %360 = vmatprep.subr.mxu0 0.0
    %361 = vmatpush1.msra.mxu0 0.0
    %362 = vmatprep.subr.mxu0 0.0
    %363 = vmatpush1.msra.mxu0 0.0
    %364 = vmatprep.subr.mxu0 0.0
    %365 = vmatpush1.msra.mxu0 0.0
    %366 = vmatprep.subr.mxu0 0.0
    %367 = vmatpush1.msra.mxu0 0.0
    %368 = vmatprep.subr.mxu0 0.0
    %369 = vmatpush1.msra.mxu0 0.0
    %370 = vmatprep.subr.mxu0 0.0
    %371 = vmatpush1.msra.mxu0 0.0
    %372 = vmatprep.subr.mxu0 0.0
    %373 = vmatpush1.msra.mxu0 0.0
    %374 = vmatprep.subr.mxu0 0.0
    %375 = vmatpush1.msra.mxu0 0.0
    %376 = vmatprep.subr.mxu0 0.0
    %377 = vmatpush1.msra.mxu0 0.0
    %378 = vmatprep.subr.mxu0 0.0
    %379 = vmatpush1.msra.mxu0 0.0
    %380 = vmatprep.mubr.f32.mxu0 0.0
    %381 = vmatmul.mubr.f32.gmra.mrb[0].mxu0 %v314
    %v382 = vpop.f32.mrb[0].mxu0
    %v383 = vadd.f32 0.0, %v382
    %v384 = vpop.f32.mrb[0].mxu0
    %385 = vdwg.mxu0
    %v386 = vmul.f32 %v209, %v209
    %vm387 = vcmask 254976
    %v388 = vsel %vm387, %v386, 0.0
    %389 = vadd.xlane.f32.xlu0 %v388
    %v390 = vpop.xlane.xlu0 %389
    %v391 = vmul.f32 %v312, %v312
    %v392 = vsel %vm387, %v391, 0.0
    %393 = vadd.xlane.f32.xlu0 %v392
    %v394 = vpop.xlane.xlu0 %393
    %v395 = vadd.f32 %v390, %v394
    %v396 = vmul.f32 %v383, %v383
    %v397 = vsel %vm387, %v396, 0.0
    %398 = vadd.xlane.f32.xlu0 %v397
    %v399 = vpop.xlane.xlu0 %398
    %v400 = vadd.f32 %v395, %v399
    %v401 = vadd.f32 %v400, 1e-12
    %v402 = vrsqrt.pop %v401
    %v403 = vpack.c.bf16 %v209, %v209
    %v404 = vpack.c.bf16 %v312, %v312
    %v409 = vunpack.c.l.b16 %v44
    %v410 = vunpack.c.l.b16 %v45
    %v411 = vunpack.c.l.b16 %v46
    %v412 = vunpack.c.l.b16 %v47
    %v413 = vpack.c.b16 %v410, %v409
    %v414 = vpack.c.b16 %v412, %v411
    %v418 = vsel %vm313, %v404, 0
    %420 = vmatprep.subr.bf16.mxu0 0
    %421 = vmatpush1.bf16.msra.mxu0 %v413
    %422 = vmatprep.subr.bf16.mxu0 0
    %423 = vmatpush1.bf16.msra.mxu0 %v414
    %424 = vmatprep.subr.bf16.mxu0 0
    %425 = vmatpush1.bf16.msra.mxu0 0
    %426 = vmatprep.subr.bf16.mxu0 0
    %427 = vmatpush1.bf16.msra.mxu0 0
    %428 = vmatprep.subr.bf16.mxu0 0
    %429 = vmatpush1.bf16.msra.mxu0 0
    %430 = vmatprep.subr.bf16.mxu0 0
    %431 = vmatpush1.bf16.msra.mxu0 0
    %432 = vmatprep.subr.bf16.mxu0 0
    %433 = vmatpush1.bf16.msra.mxu0 0
    %434 = vmatprep.subr.bf16.mxu0 0
    %435 = vmatpush1.bf16.msra.mxu0 0
    %436 = vmatprep.subr.bf16.mxu0 0
    %437 = vmatpush1.bf16.msra.mxu0 0
    %438 = vmatprep.subr.bf16.mxu0 0
    %439 = vmatpush1.bf16.msra.mxu0 0
    %440 = vmatprep.subr.bf16.mxu0 0
    %441 = vmatpush1.bf16.msra.mxu0 0
    %442 = vmatprep.subr.bf16.mxu0 0
    %443 = vmatpush1.bf16.msra.mxu0 0
    %444 = vmatprep.subr.bf16.mxu0 0
    %445 = vmatpush1.bf16.msra.mxu0 0
    %446 = vmatprep.subr.bf16.mxu0 0
    %447 = vmatpush1.bf16.msra.mxu0 0
    %448 = vmatprep.subr.bf16.mxu0 0
    %449 = vmatpush1.bf16.msra.mxu0 0
    %450 = vmatprep.subr.bf16.mxu0 0
    %451 = vmatpush1.bf16.msra.mxu0 0
    %452 = vmatprep.mubr.bf16.mxu0 0
    %453 = vmatmul.mubr.bf16.gmra.mrb[0].mxu0 %v418
    %v454 = vpop.f32.mrb[0].mxu0
    %v455 = vadd.f32 0.0, %v454
    %v456 = vpop.f32.mrb[0].mxu0
    %v457 = vpop.f32.mrb[0].mxu0
    %v458 = vpop.f32.mrb[0].mxu0
    %459 = vdwg.mxu0
    %v464 = vunpack.c.l.b16 %v40
    %v465 = vunpack.c.l.b16 %v41
    %v466 = vunpack.c.l.b16 %v42
    %v467 = vunpack.c.l.b16 %v43
    %v468 = vpack.c.b16 %v465, %v464
    %v469 = vpack.c.b16 %v467, %v466
    %v473 = vsel %vm313, %v403, 0
    %475 = vmatprep.subr.bf16.mxu0 0
    %476 = vmatpush1.bf16.msra.mxu0 %v468
    %477 = vmatprep.subr.bf16.mxu0 0
    %478 = vmatpush1.bf16.msra.mxu0 %v469
    %479 = vmatprep.subr.bf16.mxu0 0
    %480 = vmatpush1.bf16.msra.mxu0 0
    %481 = vmatprep.subr.bf16.mxu0 0
    %482 = vmatpush1.bf16.msra.mxu0 0
    %483 = vmatprep.subr.bf16.mxu0 0
    %484 = vmatpush1.bf16.msra.mxu0 0
    %485 = vmatprep.subr.bf16.mxu0 0
    %486 = vmatpush1.bf16.msra.mxu0 0
    %487 = vmatprep.subr.bf16.mxu0 0
    %488 = vmatpush1.bf16.msra.mxu0 0
    %489 = vmatprep.subr.bf16.mxu0 0
    %490 = vmatpush1.bf16.msra.mxu0 0
    %491 = vmatprep.subr.bf16.mxu0 0
    %492 = vmatpush1.bf16.msra.mxu0 0
    %493 = vmatprep.subr.bf16.mxu0 0
    %494 = vmatpush1.bf16.msra.mxu0 0
    %495 = vmatprep.subr.bf16.mxu0 0
    %496 = vmatpush1.bf16.msra.mxu0 0
    %497 = vmatprep.subr.bf16.mxu0 0
    %498 = vmatpush1.bf16.msra.mxu0 0
    %499 = vmatprep.subr.bf16.mxu0 0
    %500 = vmatpush1.bf16.msra.mxu0 0
    %501 = vmatprep.subr.bf16.mxu0 0
    %502 = vmatpush1.bf16.msra.mxu0 0
    %503 = vmatprep.subr.bf16.mxu0 0
    %504 = vmatpush1.bf16.msra.mxu0 0
    %505 = vmatprep.subr.bf16.mxu0 0
    %506 = vmatpush1.bf16.msra.mxu0 0
    %507 = vmatprep.mubr.bf16.mxu0 0
    %508 = vmatmul.mubr.bf16.gmra.mrb[0].mxu0 %v473
    %v509 = vpop.f32.mrb[0].mxu0
    %v510 = vadd.f32 %v455, %v509
    %v511 = vpop.f32.mrb[0].mxu0
    %v512 = vpop.f32.mrb[0].mxu0
    %v513 = vpop.f32.mrb[0].mxu0
    %514 = vdwg.mxu0
    %v515 = vpack.c.bf16 %v383, %v383
    %v520 = vunpack.c.l.b16 %v48
    %v521 = vunpack.c.l.b16 %v49
    %v522 = vunpack.c.l.b16 %v50
    %v523 = vunpack.c.l.b16 %v51
    %v524 = vpack.c.b16 %v521, %v520
    %v525 = vpack.c.b16 %v523, %v522
    %v529 = vsel %vm313, %v515, 0
    %531 = vmatprep.subr.bf16.mxu0 0
    %532 = vmatpush1.bf16.msra.mxu0 %v524
    %533 = vmatprep.subr.bf16.mxu0 0
    %534 = vmatpush1.bf16.msra.mxu0 %v525
    %535 = vmatprep.subr.bf16.mxu0 0
    %536 = vmatpush1.bf16.msra.mxu0 0
    %537 = vmatprep.subr.bf16.mxu0 0
    %538 = vmatpush1.bf16.msra.mxu0 0
    %539 = vmatprep.subr.bf16.mxu0 0
    %540 = vmatpush1.bf16.msra.mxu0 0
    %541 = vmatprep.subr.bf16.mxu0 0
    %542 = vmatpush1.bf16.msra.mxu0 0
    %543 = vmatprep.subr.bf16.mxu0 0
    %544 = vmatpush1.bf16.msra.mxu0 0
    %545 = vmatprep.subr.bf16.mxu0 0
    %546 = vmatpush1.bf16.msra.mxu0 0
    %547 = vmatprep.subr.bf16.mxu0 0
    %548 = vmatpush1.bf16.msra.mxu0 0
    %549 = vmatprep.subr.bf16.mxu0 0
    %550 = vmatpush1.bf16.msra.mxu0 0
    %551 = vmatprep.subr.bf16.mxu0 0
    %552 = vmatpush1.bf16.msra.mxu0 0
    %553 = vmatprep.subr.bf16.mxu0 0
    %554 = vmatpush1.bf16.msra.mxu0 0
    %555 = vmatprep.subr.bf16.mxu0 0
    %556 = vmatpush1.bf16.msra.mxu0 0
    %557 = vmatprep.subr.bf16.mxu0 0
    %558 = vmatpush1.bf16.msra.mxu0 0
    %559 = vmatprep.subr.bf16.mxu0 0
    %560 = vmatpush1.bf16.msra.mxu0 0
    %561 = vmatprep.subr.bf16.mxu0 0
    %562 = vmatpush1.bf16.msra.mxu0 0
    %563 = vmatprep.mubr.bf16.mxu0 0
    %564 = vmatmul.mubr.bf16.gmra.mrb[0].mxu0 %v529
    %v565 = vpop.f32.mrb[0].mxu0
    %v566 = vadd.f32 0.0, %v565
    %v567 = vpop.f32.mrb[0].mxu0
    %v568 = vpop.f32.mrb[0].mxu0
    %v569 = vpop.f32.mrb[0].mxu0
    %570 = vdwg.mxu0
    %v571 = vadd.f32 %v510, %v566
    %v572 = vmul.f32 %v571, %v402
    %v573 = vlaneseq
    %v574 = vshrl.u32 %v573, 7
    %v575 = vsub.s32 0, %v574
    %v576 = vrot.slane %v84, %v575
    %v577 = vadd.f32 %v572, %v576
    %vm578 = vcmask 1041408
    %v579 = vsel %vm578, %v577, 0.0
    %580 = vadd.xlane.f32.xlu0 %v579
    %v581 = vpop.xlane.xlu0 %580
    %v582 = vrcp.pop 128.0
    %v583 = vmul.f32 %v581, %v582
    %v584 = vsub.f32 %v577, %v583
    %v585 = vmul.f32 %v584, %v584
    %v586 = vsel %vm578, %v585, 0.0
    %587 = vadd.xlane.f32.xlu0 %v586
    %v588 = vpop.xlane.xlu0 %587
    %v589 = vmul.f32 %v588, %v582
    %v590 = vadd.f32 %v589, 1e-05
    %v591 = vrsqrt.pop %v590
    %v592 = vmul.f32 %v584, %v591
    %v593 = vlaneseq
    %v594 = vshrl.u32 %v593, 7
    %v595 = vsub.s32 1, %v594
    %v596 = vrot.slane %v84, %v595
    %v597 = vmul.f32 %v592, %v596
    %v598 = vlaneseq
    %v599 = vshrl.u32 %v598, 7
    %v600 = vsub.s32 2, %v599
    %v601 = vrot.slane %v84, %v600
    %v602 = vadd.f32 %v597, %v601
    %vm603 = vcmp.ge.f32.partialorder %v602, 0.0
    %v604 = vmul.f32 %v602, 0.01
    %v605 = vsel %vm603, %v602, %v604
    %v606 = vpack.c.bf16 %v605, %v605
    %v607 = vlaneseq
    %v608 = vshrl.u32 %v607, 7
    %v609 = vsub.s32 3, %v608
    %v610 = vrot.slane %v84, %v609
    %v627 = vunpack.c.l.b16 %v52
    %v628 = vunpack.c.l.b16 %v53
    %v629 = vunpack.c.l.b16 %v54
    %v630 = vunpack.c.l.b16 %v55
    %v631 = vunpack.c.l.b16 %v56
    %v632 = vunpack.c.l.b16 %v57
    %v633 = vunpack.c.l.b16 %v58
    %v634 = vunpack.c.l.b16 %v59
    %v635 = vunpack.c.l.b16 %v60
    %v636 = vunpack.c.l.b16 %v61
    %v637 = vunpack.c.l.b16 %v62
    %v638 = vunpack.c.l.b16 %v63
    %v639 = vunpack.c.l.b16 %v64
    %v640 = vunpack.c.l.b16 %v65
    %v641 = vunpack.c.l.b16 %v66
    %v642 = vunpack.c.l.b16 %v67
    %v643 = vpack.c.b16 %v628, %v627
    %v644 = vpack.c.b16 %v630, %v629
    %v645 = vpack.c.b16 %v632, %v631
    %v646 = vpack.c.b16 %v634, %v633
    %v647 = vpack.c.b16 %v636, %v635
    %v648 = vpack.c.b16 %v638, %v637
    %v649 = vpack.c.b16 %v640, %v639
    %v650 = vpack.c.b16 %v642, %v641
    %659 = vmatprep.subr.bf16.mxu0 0
    %660 = vmatpush1.bf16.msra.mxu0 %v643
    %661 = vmatprep.subr.bf16.mxu0 0
    %662 = vmatpush1.bf16.msra.mxu0 %v644
    %663 = vmatprep.subr.bf16.mxu0 0
    %664 = vmatpush1.bf16.msra.mxu0 %v645
    %665 = vmatprep.subr.bf16.mxu0 0
    %666 = vmatpush1.bf16.msra.mxu0 %v646
    %667 = vmatprep.subr.bf16.mxu0 0
    %668 = vmatpush1.bf16.msra.mxu0 %v647
    %669 = vmatprep.subr.bf16.mxu0 0
    %670 = vmatpush1.bf16.msra.mxu0 %v648
    %671 = vmatprep.subr.bf16.mxu0 0
    %672 = vmatpush1.bf16.msra.mxu0 %v649
    %673 = vmatprep.subr.bf16.mxu0 0
    %674 = vmatpush1.bf16.msra.mxu0 %v650
    %675 = vmatprep.subr.bf16.mxu0 0
    %676 = vmatpush1.bf16.msra.mxu0 0
    %677 = vmatprep.subr.bf16.mxu0 0
    %678 = vmatpush1.bf16.msra.mxu0 0
    %679 = vmatprep.subr.bf16.mxu0 0
    %680 = vmatpush1.bf16.msra.mxu0 0
    %681 = vmatprep.subr.bf16.mxu0 0
    %682 = vmatpush1.bf16.msra.mxu0 0
    %683 = vmatprep.subr.bf16.mxu0 0
    %684 = vmatpush1.bf16.msra.mxu0 0
    %685 = vmatprep.subr.bf16.mxu0 0
    %686 = vmatpush1.bf16.msra.mxu0 0
    %687 = vmatprep.subr.bf16.mxu0 0
    %688 = vmatpush1.bf16.msra.mxu0 0
    %689 = vmatprep.subr.bf16.mxu0 0
    %690 = vmatpush1.bf16.msra.mxu0 0
    %691 = vmatprep.mubr.bf16.mxu0 0
    %692 = vmatmul.mubr.bf16.gmra.mrb[0].mxu0 %v606
    %v693 = vpop.f32.mrb[0].mxu0
    %v694 = vadd.f32 %v610, %v693
    %v695 = vpop.f32.mrb[0].mxu0
    %v696 = vpop.f32.mrb[0].mxu0
    %v697 = vpop.f32.mrb[0].mxu0
    %698 = vdwg.mxu0
    %v699 = vsel %vm578, %v694, 0.0
    %700 = vadd.xlane.f32.xlu0 %v699
    %v701 = vpop.xlane.xlu0 %700
    %v702 = vmul.f32 %v701, %v582
    %v703 = vsub.f32 %v694, %v702
    %v704 = vmul.f32 %v703, %v703
    %v705 = vsel %vm578, %v704, 0.0
    %706 = vadd.xlane.f32.xlu0 %v705
    %v707 = vpop.xlane.xlu0 %706
    %v708 = vmul.f32 %v707, %v582
    %v709 = vadd.f32 %v708, 1e-05
    %v710 = vrsqrt.pop %v709
    %v711 = vmul.f32 %v703, %v710
    %v712 = vlaneseq
    %v713 = vshrl.u32 %v712, 7
    %v714 = vsub.s32 4, %v713
    %v715 = vrot.slane %v84, %v714
    %v716 = vmul.f32 %v711, %v715
    %v717 = vlaneseq
    %v718 = vshrl.u32 %v717, 7
    %v719 = vsub.s32 5, %v718
    %v720 = vrot.slane %v84, %v719
    %v721 = vadd.f32 %v716, %v720
    %vm722 = vcmp.ge.f32.partialorder %v721, 0.0
    %v723 = vmul.f32 %v721, 0.01
    %v724 = vsel %vm722, %v721, %v723
    %v725 = vpack.c.bf16 %v724, %v724
    %v727 = vlaneseq
    %v728 = vshrl.u32 %v727, 7
    %v729 = vsub.s32 0, %v728
    %v730 = vrot.slane %v85, %v729
    %v731 = vlaneseq
    %v732 = vshrl.u32 %v731, 7
    %v733 = vsub.s32 1, %v732
    %v734 = vrot.slane %v85, %v733
    %v753 = vunpack.c.l.b16 %v68
    %v754 = vunpack.c.h.b16 %v68
    %v755 = vunpack.c.l.b16 %v69
    %v756 = vunpack.c.h.b16 %v69
    %v757 = vunpack.c.l.b16 %v70
    %v758 = vunpack.c.h.b16 %v70
    %v759 = vunpack.c.l.b16 %v71
    %v760 = vunpack.c.h.b16 %v71
    %v761 = vunpack.c.l.b16 %v72
    %v762 = vunpack.c.h.b16 %v72
    %v763 = vunpack.c.l.b16 %v73
    %v764 = vunpack.c.h.b16 %v73
    %v765 = vunpack.c.l.b16 %v74
    %v766 = vunpack.c.h.b16 %v74
    %v767 = vunpack.c.l.b16 %v75
    %v768 = vunpack.c.h.b16 %v75
    %v769 = vunpack.c.l.b16 %v76
    %v770 = vunpack.c.h.b16 %v76
    %v771 = vunpack.c.l.b16 %v77
    %v772 = vunpack.c.h.b16 %v77
    %v773 = vunpack.c.l.b16 %v78
    %v774 = vunpack.c.h.b16 %v78
    %v775 = vunpack.c.l.b16 %v79
    %v776 = vunpack.c.h.b16 %v79
    %v777 = vunpack.c.l.b16 %v80
    %v778 = vunpack.c.h.b16 %v80
    %v779 = vunpack.c.l.b16 %v81
    %v780 = vunpack.c.h.b16 %v81
    %v781 = vunpack.c.l.b16 %v82
    %v782 = vunpack.c.h.b16 %v82
    %v783 = vunpack.c.l.b16 %v83
    %v784 = vunpack.c.h.b16 %v83
    %v785 = vpack.c.b16 %v755, %v753
    %v786 = vpack.c.b16 %v756, %v754
    %v787 = vpack.c.b16 %v759, %v757
    %v788 = vpack.c.b16 %v760, %v758
    %v789 = vpack.c.b16 %v763, %v761
    %v790 = vpack.c.b16 %v764, %v762
    %v791 = vpack.c.b16 %v767, %v765
    %v792 = vpack.c.b16 %v768, %v766
    %v793 = vpack.c.b16 %v771, %v769
    %v794 = vpack.c.b16 %v772, %v770
    %v795 = vpack.c.b16 %v775, %v773
    %v796 = vpack.c.b16 %v776, %v774
    %v797 = vpack.c.b16 %v779, %v777
    %v798 = vpack.c.b16 %v780, %v778
    %v799 = vpack.c.b16 %v783, %v781
    %v800 = vpack.c.b16 %v784, %v782
    %817 = vmatprep.subr.bf16.mxu0 %v786
    %818 = vmatpush1.bf16.msra.mxu0 %v785
    %819 = vmatprep.subr.bf16.mxu0 %v788
    %820 = vmatpush1.bf16.msra.mxu0 %v787
    %821 = vmatprep.subr.bf16.mxu0 %v790
    %822 = vmatpush1.bf16.msra.mxu0 %v789
    %823 = vmatprep.subr.bf16.mxu0 %v792
    %824 = vmatpush1.bf16.msra.mxu0 %v791
    %825 = vmatprep.subr.bf16.mxu0 %v794
    %826 = vmatpush1.bf16.msra.mxu0 %v793
    %827 = vmatprep.subr.bf16.mxu0 %v796
    %828 = vmatpush1.bf16.msra.mxu0 %v795
    %829 = vmatprep.subr.bf16.mxu0 %v798
    %830 = vmatpush1.bf16.msra.mxu0 %v797
    %831 = vmatprep.subr.bf16.mxu0 %v800
    %832 = vmatpush1.bf16.msra.mxu0 %v799
    %833 = vmatprep.subr.bf16.mxu0 0
    %834 = vmatpush1.bf16.msra.mxu0 0
    %835 = vmatprep.subr.bf16.mxu0 0
    %836 = vmatpush1.bf16.msra.mxu0 0
    %837 = vmatprep.subr.bf16.mxu0 0
    %838 = vmatpush1.bf16.msra.mxu0 0
    %839 = vmatprep.subr.bf16.mxu0 0
    %840 = vmatpush1.bf16.msra.mxu0 0
    %841 = vmatprep.subr.bf16.mxu0 0
    %842 = vmatpush1.bf16.msra.mxu0 0
    %843 = vmatprep.subr.bf16.mxu0 0
    %844 = vmatpush1.bf16.msra.mxu0 0
    %845 = vmatprep.subr.bf16.mxu0 0
    %846 = vmatpush1.bf16.msra.mxu0 0
    %847 = vmatprep.subr.bf16.mxu0 0
    %848 = vmatpush1.bf16.msra.mxu0 0
    %849 = vmatprep.mubr.bf16.mxu0 0
    %850 = vmatmul.mubr.bf16.gmra.mrb[0].mxu0 %v725
    %v851 = vpop.f32.mrb[0].mxu0
    %v852 = vadd.f32 %v730, %v851
    %v853 = vpop.f32.mrb[0].mxu0
    %v854 = vadd.f32 %v734, %v853
    %v855 = vpop.f32.mrb[0].mxu0
    %v856 = vpop.f32.mrb[0].mxu0
    %857 = vdwg.mxu0
    %858 = vst [vmem:[#allocation2] sm:$0x3] %v852
    %859 = vst [vmem:[#allocation4] sm:$0x3] %v854
    // Predicated region
    $region34: #{neti_mapper_forward.1} parent=1 // pred_check
      _
    $region35: #{neti_mapper_forward.1} parent=1 // pred_check_branch
      %861 = sbr.rel (0) target = $region37
    $region36: #{neti_mapper_forward.1} parent=1 // pred_region
      %s863 = ssub.s32 32, 32
      %864 = vsyncadd [#allocation3], %s863
      %s866 = sshll.u32 [#allocation2], 4
      %s867 = int_to_ptr.vmem [resolvable:$true] %s866
      %869 = dma.vmem_to_hbm [thread:$0]  %s867, 32, %s8, [#allocation3]
    $region37: #{neti_mapper_forward.1} parent=1 // pred_fallthru
      _
    // Predicated region
    $region38: #{neti_mapper_forward.1} parent=1 // pred_check
      _
    $region39: #{neti_mapper_forward.1} parent=1 // pred_check_branch
      %871 = sbr.rel (0) target = $region41
    $region40: #{neti_mapper_forward.1} parent=1 // pred_region
      %s873 = ssub.s32 32, 32
      %874 = vsyncadd [#allocation5], %s873
      %s876 = sshll.u32 [#allocation4], 4
      %s877 = int_to_ptr.vmem [resolvable:$true] %s876
      %879 = dma.vmem_to_hbm [thread:$0]  %s877, 32, %s9, [#allocation5]
    $region41: #{neti_mapper_forward.1} parent=1 // pred_fallthru
      _
    // Predicated region
    $region42: #{neti_mapper_forward.1} parent=1 // pred_check
      _
    $region43: #{neti_mapper_forward.1} parent=1 // pred_check_branch
      %881 = sbr.rel (0) target = $region45
    $region44: #{neti_mapper_forward.1} parent=1 // pred_region
      %882 = dma.done [#allocation3], 32
    $region45: #{neti_mapper_forward.1} parent=1 // pred_fallthru
      _
    // Predicated region
    $region46: #{neti_mapper_forward.1} parent=1 // pred_check
      _
    $region47: #{neti_mapper_forward.1} parent=1 // pred_check_branch
      %884 = sbr.rel (0) target = $region49
    $region48: #{neti_mapper_forward.1} parent=1 // pred_region
      %885 = dma.done [#allocation5], 32
    $region49: #{neti_mapper_forward.1} parent=1 // pred_fallthru
      _
    %886 = vsyncpa [#allocation3], 1
    %887 = vsyncpa [#allocation5], 1

</llo_original>
